<compile_context>
chip_gen: v7x
topology: tpu7x:2x2x1
jax: 0.10.0
libtpu: 0.0.40
codegen_flags: <defaults>
</compile_context>

<pallas_src>
import jax
import jax.numpy as jnp
from jax.experimental import pallas as pl
from jax.experimental.pallas import tpu as pltpu

LANES = 128
SUBLANES = 8
EPS = 1e-07
THRESHOLD = 0.5

_SMALL_TOTAL = 64 * 1024               # below this many elements: plain XLA
_BLOCK_BYTE_BUDGET = 8 * 1024 * 1024   # combined input bytes per grid step


def _ceil_div(a, b):
    return -(-a // b)


def _fused_counts(pr, gt, threshold):
    """tp = sum(gt where pr > threshold), gsum = sum(gt); f32 accumulation."""
    prf = pr.astype(jnp.float32)
    gtf = gt.astype(jnp.float32)
    tp = jnp.sum(jnp.where(prf > threshold, gtf, 0.0))
    return tp, jnp.sum(gtf)


def _default_num_splits():
    # 2 TensorCores per chip only on v7x; on v5e/v6e a second split is just a
    # serialized loop (pure overhead).
    try:
        kind = jax.devices()[0].device_kind.lower()
    except Exception:
        return 1
    return 2 if ("v7" in kind or "7x" in kind) else 1


def _make_recall_kernel(threshold, rows_total, tile_rows, steps_per_split):
    def kernel(pr_ref, gt_ref, tp_out_ref, gt_out_ref, tp_acc, gt_acc):
        c = pl.program_id(0)
        i = pl.program_id(1)

        # Reset the per-split accumulators at the start of each split's loop.
        @pl.when(i == 0)
        def _init():
            tp_acc[...] = jnp.zeros_like(tp_acc)
            gt_acc[...] = jnp.zeros_like(gt_acc)

        # Global (un-clamped) row offset of this block.  Blocks extending past
        # the end of the array are masked below.
        row_start = (c * steps_per_split + i) * tile_rows

        # Blocks are (tile_rows, 128); cast on-chip, keep (8,128) vreg layout.
        pr = pr_ref[...].astype(jnp.float32)
        gt = gt_ref[...].astype(jnp.float32)

        def _accumulate(gt_vals, pr_vals):
            # Fused threshold * gt: select instead of cast+mul.
            tp_contrib = jnp.where(pr_vals > threshold, gt_vals, 0.0)
            # Pure VPU accumulation into (8,128) vector accumulators; the
            # reshape is a free sublane split (tile_rows % 8 == 0).
            tp_acc[...] += jnp.sum(tp_contrib.reshape(-1, SUBLANES, LANES), axis=0)
            gt_acc[...] += jnp.sum(gt_vals.reshape(-1, SUBLANES, LANES), axis=0)

        # Hot path: block fully inside the array (no masking work).
        @pl.when(row_start + tile_rows <= rows_total)
        def _full():
            _accumulate(gt, pr)

        # Edge path: partial or fully out-of-bounds block.  The DMA pads the
        # block with unspecified values, so zero gt for invalid rows; gt==0
        # contributes nothing to either tp or gsum.
        @pl.when(row_start + tile_rows > rows_total)
        def _partial():
            rows = jax.lax.broadcasted_iota(jnp.int32, (tile_rows, LANES), 0)
            valid = rows < (rows_total - row_start)
            _accumulate(jnp.where(valid, gt, 0.0), pr)

        # Write this split's vector partials once, on its last step.
        @pl.when(i == pl.num_programs(1) - 1)
        def _finalize():
            tp_out_ref[...] = tp_acc[...]
            gt_out_ref[...] = gt_acc[...]

    return kernel


def recall_pallas(y_pr, y_gt, eps=EPS, threshold=THRESHOLD,
                  tile_rows=None, num_splits=None):
    # TODO(synk): activation (sigmoid/softmax2d) and ignore_channels are not
    # implemented; module defaults (identity activation, no ignored channels)
    # are the semantics covered here.
    assert y_pr.shape == y_gt.shape
    total = int(y_pr.size)

    pr_flat = jnp.ravel(y_pr)   # keep native dtype -> fewer HBM bytes
    gt_flat = jnp.ravel(y_gt)

    # Small-input fast path: fixed pallas_call / grid overhead dominates there.
    if total < _SMALL_TOTAL:
        tp, gsum = _fused_counts(pr_flat, gt_flat, threshold)
        return (tp + eps) / (gsum + eps)

    rows_total = total // LANES          # >= 512 here
    main = rows_total * LANES

    # --- tile sizing (bytes-per-step budget, multiple of 8 rows) ------------
    row_bytes = LANES * (pr_flat.dtype.itemsize + gt_flat.dtype.itemsize)
    if tile_rows is None:
        tile_rows = _BLOCK_BYTE_BUDGET // row_bytes   # 8192 for f32+f32
    tile_rows = int(tile_rows)
    tile_rows = max(SUBLANES, (tile_rows // SUBLANES) * SUBLANES)
    tile_rows = min(tile_rows, (rows_total // SUBLANES) * SUBLANES)

    total_blocks = _ceil_div(rows_total, tile_rows)

    if num_splits is None:
        num_splits = _default_num_splits()
    num_splits = max(1, min(int(num_splits), int(total_blocks)))
    steps_per_split = _ceil_div(total_blocks, num_splits)

    # Free 2-D view of the flattened stream (slice only if a <128-elem tail).
    if main == total:
        pr_main = pr_flat.reshape(rows_total, LANES)
        gt_main = gt_flat.reshape(rows_total, LANES)
    else:
        pr_main = pr_flat[:main].reshape(rows_total, LANES)
        gt_main = gt_flat[:main].reshape(rows_total, LANES)

    # Explicit scoped-VMEM limit: 2 pipeline buffers x both inputs x block
    # bytes (+ slack) so bigger tiles don't trip v5e's 16 MiB default.
    block_bytes = 2 * tile_rows * row_bytes
    vmem_limit = int(min(56 * 1024 * 1024,
                         max(block_bytes + (8 << 20), 16 << 20)))

    def in_index(c, i):
        # Clamp so a fully out-of-bounds trailing block (grid round-up) still
        # maps to a valid block; its contribution is masked out in-kernel.
        return (jnp.minimum(c * steps_per_split + i, total_blocks - 1), 0)

    cost = pl.CostEstimate(
        flops=3 * main, transcendentals=0,
        bytes_accessed=main * (pr_flat.dtype.itemsize + gt_flat.dtype.itemsize))

    tp_out, gt_out = pl.pallas_call(
        _make_recall_kernel(threshold, rows_total, tile_rows, steps_per_split),
        out_shape=(
            jax.ShapeDtypeStruct((num_splits * SUBLANES, LANES), jnp.float32),
            jax.ShapeDtypeStruct((num_splits * SUBLANES, LANES), jnp.float32),
        ),
        grid_spec=pltpu.PrefetchScalarGridSpec(
            num_scalar_prefetch=0,
            grid=(num_splits, steps_per_split),
            in_specs=[
                pl.BlockSpec((tile_rows, LANES), in_index),
                pl.BlockSpec((tile_rows, LANES), in_index),
            ],
            out_specs=(
                pl.BlockSpec((SUBLANES, LANES), lambda c, i: (c, 0)),
                pl.BlockSpec((SUBLANES, LANES), lambda c, i: (c, 0)),
            ),
            scratch_shapes=[
                pltpu.VMEM((SUBLANES, LANES), jnp.float32),
                pltpu.VMEM((SUBLANES, LANES), jnp.float32),
            ],
        ),
        compiler_params=pltpu.CompilerParams(
            dimension_semantics=("parallel", "arbitrary"),
            vmem_limit_bytes=vmem_limit,
        ),
        cost_estimate=cost,
    )(pr_main, gt_main)

    tp = jnp.sum(tp_out)
    gsum = jnp.sum(gt_out)

    if main < total:
        # < 128 leftover elements (cannot form a 128-lane row): trivial jnp.
        tp_t, gs_t = _fused_counts(pr_flat[main:], gt_flat[main:], threshold)
        tp = tp + tp_t
        gsum = gsum + gs_t

    # denom = sum(gt) = tp + fn, exactly as in the reference.
    return (tp + eps) / (gsum + eps)


def recall_ref(y_pr, y_gt, eps=EPS, threshold=THRESHOLD):
    pr = (y_pr > threshold).astype(y_pr.dtype)
    tp = jnp.sum(y_gt * pr)
    fn = jnp.sum(y_gt) - tp
    return (tp + eps) / (tp + fn + eps)


if __name__ == "__main__":
    key = jax.random.PRNGKey(0)
    k1, k2, k3, k4 = jax.random.split(key, 4)

    # 1) Small NCHW input (batch=2, channels=4, 16x16) -> small-input fast path.
    y_pr_s = jax.random.uniform(k1, (2, 4, 16, 16), dtype=jnp.float32)
    y_gt_s = (jax.random.uniform(k2, (2, 4, 16, 16)) > 0.5).astype(jnp.float32)
    got_s = jax.block_until_ready(recall_pallas(y_pr_s, y_gt_s))
    exp_s = jax.block_until_ready(recall_ref(y_pr_s, y_gt_s))
    assert jnp.allclose(got_s, exp_s, rtol=1e-5, atol=1e-6), (got_s, exp_s)

    # 2) Larger ragged NCHW input -> exercises the Pallas kernel, the masked
    #    partial last block and the <128-element remainder.
    y_pr_b = jax.random.uniform(k3, (2, 4, 67, 129), dtype=jnp.float32)
    y_gt_b = (jax.random.uniform(k4, (2, 4, 67, 129)) > 0.5).astype(jnp.float32)
    got_b = jax.block_until_ready(recall_pallas(y_pr_b, y_gt_b, tile_rows=128))
    exp_b = jax.block_until_ready(recall_ref(y_pr_b, y_gt_b))
    assert jnp.allclose(got_b, exp_b, rtol=1e-5, atol=1e-6), (got_b, exp_b)

    # 3) Same input with a forced 2-way split (v7x-style "parallel" leading
    #    axis) including a fully out-of-bounds trailing block.
    got_p = jax.block_until_ready(
        recall_pallas(y_pr_b, y_gt_b, tile_rows=64, num_splits=2))
    assert jnp.allclose(got_p, exp_b, rtol=1e-5, atol=1e-6), (got_p, exp_b)

    print("KERNEL_OK")
</pallas_src>

<mosaic_0001>
module attributes {stable_mosaic.version = 11 : i64} {
  func.func @kernel(%arg0: i32, %arg1: i32, %arg2: memref<128x128xf32, #tpu.memory_space<vmem>>, %arg3: memref<128x128xf32, #tpu.memory_space<vmem>>, %arg4: memref<8x128xf32, #tpu.memory_space<vmem>>, %arg5: memref<8x128xf32, #tpu.memory_space<vmem>>, %arg6: memref<8x128xf32, #tpu.memory_space<vmem>>, %arg7: memref<8x128xf32, #tpu.memory_space<vmem>>) attributes {dimension_semantics = [#tpu.dimension_semantics<parallel>, #tpu.dimension_semantics<arbitrary>], iteration_bounds = array<i64: 1, 5>, scalar_prefetch = 0 : i64, scratch_operands = 2 : i64, tpu.core_type = #tpu.core_type<tc>, window_params = [{transform_indices = @transform_0, window_bounds = array<i64: 128, 128>}, {transform_indices = @transform_1, window_bounds = array<i64: 128, 128>}, {transform_indices = @transform_2, window_bounds = array<i64: 8, 128>}, {transform_indices = @transform_3, window_bounds = array<i64: 8, 128>}]} {
    %c0_i32 = arith.constant 0 : i32
    %0 = arith.cmpi eq, %arg1, %c0_i32 : i32
    %1 = arith.extui %0 : i1 to i32
    %c0_i32_0 = arith.constant 0 : i32
    %2 = arith.cmpi ne, %1, %c0_i32_0 : i32
    scf.if %2 {
      %cst = arith.constant 0.000000e+00 : f32
      %19 = vector.broadcast %cst : f32 to vector<8x128xf32>
      %c0_10 = arith.constant 0 : index
      %c0_11 = arith.constant 0 : index
      %20 = vector.load %arg6[%c0_10, %c0_11] : memref<8x128xf32, #tpu.memory_space<vmem>>, vector<8x128xf32>
      tpu.vector_store %arg6[%c0_10, %c0_11], %19 {strides = array<i32>} : memref<8x128xf32, #tpu.memory_space<vmem>>, vector<8x128xf32>,
      %cst_12 = arith.constant 0.000000e+00 : f32
      %21 = vector.broadcast %cst_12 : f32 to vector<8x128xf32>
      %c0_13 = arith.constant 0 : index
      %c0_14 = arith.constant 0 : index
      %22 = vector.load %arg7[%c0_13, %c0_14] : memref<8x128xf32, #tpu.memory_space<vmem>>, vector<8x128xf32>
      tpu.vector_store %arg7[%c0_13, %c0_14], %21 {strides = array<i32>} : memref<8x128xf32, #tpu.memory_space<vmem>>, vector<8x128xf32>,
    } else {
    }
    %c5_i32 = arith.constant 5 : i32
    %3 = arith.muli %arg0, %c5_i32 : i32
    %4 = arith.addi %3, %arg1 : i32
    %c128_i32 = arith.constant 128 : i32
    %5 = arith.muli %4, %c128_i32 : i32
    %c0 = arith.constant 0 : index
    %c0_1 = arith.constant 0 : index
    %6 = vector.load %arg2[%c0, %c0_1] : memref<128x128xf32, #tpu.memory_space<vmem>>, vector<128x128xf32>
    %c0_2 = arith.constant 0 : index
    %c0_3 = arith.constant 0 : index
    %7 = vector.load %arg3[%c0_2, %c0_3] : memref<128x128xf32, #tpu.memory_space<vmem>>, vector<128x128xf32>
    %c128_i32_4 = arith.constant 128 : i32
    %8 = arith.addi %5, %c128_i32_4 : i32
    %c540_i32 = arith.constant 540 : i32
    %9 = arith.cmpi sle, %8, %c540_i32 : i32
    %10 = arith.extui %9 : i1 to i32
    %c0_i32_5 = arith.constant 0 : i32
    %11 = arith.cmpi ne, %10, %c0_i32_5 : i32
    scf.if %11 {
      %cst = arith.constant 5.000000e-01 : f32
      %19 = vector.broadcast %cst : f32 to vector<128x128xf32>
      %20 = arith.cmpf ogt, %6, %19 : vector<128x128xf32>
      %cst_10 = arith.constant 0.000000e+00 : f32
      %21 = vector.broadcast %cst_10 : f32 to vector<128x128xf32>
      %22 = arith.select %20, %7, %21 : vector<128x128xi1>, vector<128x128xf32>
      %c0_11 = arith.constant 0 : index
      %c0_12 = arith.constant 0 : index
      %23 = vector.load %arg6[%c0_11, %c0_12] : memref<8x128xf32, #tpu.memory_space<vmem>>, vector<8x128xf32>
      %24 = vector.shape_cast %22 : vector<128x128xf32> to vector<16x8x128xf32>
      %cst_13 = arith.constant dense<0.000000e+00> : vector<8x128xf32>
      %25 = vector.multi_reduction <add>, %24, %cst_13 [0] : vector<16x8x128xf32> to vector<8x128xf32>
      %26 = arith.addf %23, %25 : vector<8x128xf32>
      %c0_14 = arith.constant 0 : index
      %c0_15 = arith.constant 0 : index
      %27 = vector.load %arg6[%c0_14, %c0_15] : memref<8x128xf32, #tpu.memory_space<vmem>>, vector<8x128xf32>
      tpu.vector_store %arg6[%c0_14, %c0_15], %26 {strides = array<i32>} : memref<8x128xf32, #tpu.memory_space<vmem>>, vector<8x128xf32>,
      %c0_16 = arith.constant 0 : index
      %c0_17 = arith.constant 0 : index
      %28 = vector.load %arg7[%c0_16, %c0_17] : memref<8x128xf32, #tpu.memory_space<vmem>>, vector<8x128xf32>
      %29 = vector.shape_cast %7 : vector<128x128xf32> to vector<16x8x128xf32>
      %cst_18 = arith.constant dense<0.000000e+00> : vector<8x128xf32>
      %30 = vector.multi_reduction <add>, %29, %cst_18 [0] : vector<16x8x128xf32> to vector<8x128xf32>
      %31 = arith.addf %28, %30 : vector<8x128xf32>
      %c0_19 = arith.constant 0 : index
      %c0_20 = arith.constant 0 : index
      %32 = vector.load %arg7[%c0_19, %c0_20] : memref<8x128xf32, #tpu.memory_space<vmem>>, vector<8x128xf32>
      tpu.vector_store %arg7[%c0_19, %c0_20], %31 {strides = array<i32>} : memref<8x128xf32, #tpu.memory_space<vmem>>, vector<8x128xf32>,
    } else {
    }
    %c128_i32_6 = arith.constant 128 : i32
    %12 = arith.addi %5, %c128_i32_6 : i32
    %c540_i32_7 = arith.constant 540 : i32
    %13 = arith.cmpi sgt, %12, %c540_i32_7 : i32
    %14 = arith.extui %13 : i1 to i32
    %c0_i32_8 = arith.constant 0 : i32
    %15 = arith.cmpi ne, %14, %c0_i32_8 : i32
    scf.if %15 {
      %19 = tpu.iota {dimensions = array<i32: 0>} : vector<128x128xi32>
      %c540_i32_10 = arith.constant 540 : i32
      %20 = arith.subi %c540_i32_10, %5 : i32
      %21 = vector.broadcast %20 : i32 to vector<128x128xi32>
      %22 = arith.cmpi slt, %19, %21 : vector<128x128xi32>
      %cst = arith.constant 0.000000e+00 : f32
      %23 = vector.broadcast %cst : f32 to vector<128x128xf32>
      %24 = arith.select %22, %7, %23 : vector<128x128xi1>, vector<128x128xf32>
      %cst_11 = arith.constant 5.000000e-01 : f32
      %25 = vector.broadcast %cst_11 : f32 to vector<128x128xf32>
      %26 = arith.cmpf ogt, %6, %25 : vector<128x128xf32>
      %cst_12 = arith.constant 0.000000e+00 : f32
      %27 = vector.broadcast %cst_12 : f32 to vector<128x128xf32>
      %28 = arith.select %26, %24, %27 : vector<128x128xi1>, vector<128x128xf32>
      %c0_13 = arith.constant 0 : index
      %c0_14 = arith.constant 0 : index
      %29 = vector.load %arg6[%c0_13, %c0_14] : memref<8x128xf32, #tpu.memory_space<vmem>>, vector<8x128xf32>
      %30 = vector.shape_cast %28 : vector<128x128xf32> to vector<16x8x128xf32>
      %cst_15 = arith.constant dense<0.000000e+00> : vector<8x128xf32>
      %31 = vector.multi_reduction <add>, %30, %cst_15 [0] : vector<16x8x128xf32> to vector<8x128xf32>
      %32 = arith.addf %29, %31 : vector<8x128xf32>
      %c0_16 = arith.constant 0 : index
      %c0_17 = arith.constant 0 : index
      %33 = vector.load %arg6[%c0_16, %c0_17] : memref<8x128xf32, #tpu.memory_space<vmem>>, vector<8x128xf32>
      tpu.vector_store %arg6[%c0_16, %c0_17], %32 {strides = array<i32>} : memref<8x128xf32, #tpu.memory_space<vmem>>, vector<8x128xf32>,
      %c0_18 = arith.constant 0 : index
      %c0_19 = arith.constant 0 : index
      %34 = vector.load %arg7[%c0_18, %c0_19] : memref<8x128xf32, #tpu.memory_space<vmem>>, vector<8x128xf32>
      %35 = vector.shape_cast %24 : vector<128x128xf32> to vector<16x8x128xf32>
      %cst_20 = arith.constant dense<0.000000e+00> : vector<8x128xf32>
      %36 = vector.multi_reduction <add>, %35, %cst_20 [0] : vector<16x8x128xf32> to vector<8x128xf32>
      %37 = arith.addf %34, %36 : vector<8x128xf32>
      %c0_21 = arith.constant 0 : index
      %c0_22 = arith.constant 0 : index
      %38 = vector.load %arg7[%c0_21, %c0_22] : memref<8x128xf32, #tpu.memory_space<vmem>>, vector<8x128xf32>
      tpu.vector_store %arg7[%c0_21, %c0_22], %37 {strides = array<i32>} : memref<8x128xf32, #tpu.memory_space<vmem>>, vector<8x128xf32>,
    } else {
    }
    %c4_i32 = arith.constant 4 : i32
    %16 = arith.cmpi eq, %arg1, %c4_i32 : i32
    %17 = arith.extui %16 : i1 to i32
    %c0_i32_9 = arith.constant 0 : i32
    %18 = arith.cmpi ne, %17, %c0_i32_9 : i32
    scf.if %18 {
      %c0_10 = arith.constant 0 : index
      %c0_11 = arith.constant 0 : index
      %19 = vector.load %arg6[%c0_10, %c0_11] : memref<8x128xf32, #tpu.memory_space<vmem>>, vector<8x128xf32>
      %c0_12 = arith.constant 0 : index
      %c0_13 = arith.constant 0 : index
      %20 = vector.load %arg4[%c0_12, %c0_13] : memref<8x128xf32, #tpu.memory_space<vmem>>, vector<8x128xf32>
      tpu.vector_store %arg4[%c0_12, %c0_13], %19 {strides = array<i32>} : memref<8x128xf32, #tpu.memory_space<vmem>>, vector<8x128xf32>,
      %c0_14 = arith.constant 0 : index
      %c0_15 = arith.constant 0 : index
      %21 = vector.load %arg7[%c0_14, %c0_15] : memref<8x128xf32, #tpu.memory_space<vmem>>, vector<8x128xf32>
      %c0_16 = arith.constant 0 : index
      %c0_17 = arith.constant 0 : index
      %22 = vector.load %arg5[%c0_16, %c0_17] : memref<8x128xf32, #tpu.memory_space<vmem>>, vector<8x128xf32>
      tpu.vector_store %arg5[%c0_16, %c0_17], %21 {strides = array<i32>} : memref<8x128xf32, #tpu.memory_space<vmem>>, vector<8x128xf32>,
    } else {
    }
    return
  }
  func.func @transform_0(%arg0: i32, %arg1: i32) -> (i32, i32) {
    %c5_i32 = arith.constant 5 : i32
    %0 = arith.muli %arg0, %c5_i32 : i32
    %1 = arith.addi %0, %arg1 : i32
    %c4_i32 = arith.constant 4 : i32
    %2 = arith.minsi %1, %c4_i32 : i32
    %c0_i32 = arith.constant 0 : i32
    %c0_i32_0 = arith.constant 0 : i32
    return %2, %c0_i32 : i32, i32
  }
  func.func @transform_1(%arg0: i32, %arg1: i32) -> (i32, i32) {
    %c5_i32 = arith.constant 5 : i32
    %0 = arith.muli %arg0, %c5_i32 : i32
    %1 = arith.addi %0, %arg1 : i32
    %c4_i32 = arith.constant 4 : i32
    %2 = arith.minsi %1, %c4_i32 : i32
    %c0_i32 = arith.constant 0 : i32
    %c0_i32_0 = arith.constant 0 : i32
    return %2, %c0_i32 : i32, i32
  }
  func.func @transform_2(%arg0: i32, %arg1: i32) -> (i32, i32) {
    %c0_i32 = arith.constant 0 : i32
    %c0_i32_0 = arith.constant 0 : i32
    return %arg0, %c0_i32 : i32, i32
  }
  func.func @transform_3(%arg0: i32, %arg1: i32) -> (i32, i32) {
    %c0_i32 = arith.constant 0 : i32
    %c0_i32_0 = arith.constant 0 : i32
    return %arg0, %c0_i32 : i32, i32
  }
}

</mosaic_0001>

<llo_original>
// kernel: tpu_custom_call.1
$region0: #{tpu_custom_call.1}
  #allocation0 [shape = 'u32[]', space=smem, size = 0x4, offset = 0x4, fixed_abs, tag = 'smem constant byte address 0x4 - core index']
  #allocation1 [shape = 'u32[144,128]{1,0:T(1,128)}', space=vmem, size = 0x12000, scoped, tag = 'internal scratch']
  #allocation2 [shape = 'f32[8,128]{1,0:T(8,128)}', space=vmem, size = 0x1000, scoped, tag = 'scratch operand']
  #allocation3 [shape = 'f32[8,128]{1,0:T(8,128)}', space=vmem, size = 0x1000, scoped, tag = 'scratch operand']
  %s0 = inlined_call_operand.hbm [shape: f32[540,128], index: 0, kind: input, shape index: {}]
  %s1 = inlined_call_operand.hbm [shape: f32[540,128], index: 1, kind: input, shape index: {}]
  %s2 = inlined_call_operand.hbm [shape: f32[8,128], index: 2, kind: output, shape index: {0}]
  %s3 = inlined_call_operand.hbm [shape: f32[8,128], index: 3, kind: output, shape index: {1}]
  %4 = xla_tuple %s2, %s3
  %s5 = sld [smem:[#allocation0]]
  $region73: #{tpu_custom_call.1} parent=0
    _
  %s7 = ssub.s32 1, %s5
  %s8 = scalar_select 0, %s7, %s5
  $region1: #{tpu_custom_call.1} parent=0
    #allocation4 [shape = 'u8[131072]{0}', space=vmem, size = 0x20000, scoped, tag = 'input window, operand 0']
    #allocation5 [shape = 's32[2]{0}', space=sflag, size = 0x8, scoped, tag = 'scoped memory for tpu_custom_call.1']
    #allocation6 [shape = 's32[2]{0}', space=sflag, size = 0x8, scoped, tag = 'scoped memory for tpu_custom_call.1']
    #allocation7 [shape = 'u8[131072]{0}', space=vmem, size = 0x20000, scoped, tag = 'input window, operand 1']
    #allocation8 [shape = 's32[2]{0}', space=sflag, size = 0x8, scoped, tag = 'scoped memory for tpu_custom_call.1']
    #allocation9 [shape = 'u8[4096]{0}', space=vmem, size = 0x1000, scoped, tag = 'output window, operand 0, single buffered']
    #allocation10 [shape = 'u8[4096]{0}', space=vmem, size = 0x1000, scoped, tag = 'output window, operand 1, single buffered']
    #allocation11 [shape = 's32[1]{0}', space=sflag, size = 0x4, scoped, tag = 'scoped memory for tpu_custom_call.1']
    %9 = vsyncpa [#allocation5], 0
    %s10 = scalar_lea.sflag [#allocation5], 1
    %11 = vsyncpa %s10, 0
    %12 = vsyncpa [#allocation8], 0
    %s13 = scalar_lea.sflag [#allocation8], 1
    %14 = vsyncpa %s13, 0
    %15 = vsyncpa [#allocation6], 0
    %16 = vsyncpa [#allocation11], 0
    loop: start=0, step=1, limit=7
    $region2: #{tpu_custom_call.1} parent=1 // loop_pre_header
      _
    $region3: #{tpu_custom_call.1} parent=1 // loop_header
      %s18 = sphi 0, %s22
      %p19 = scmp.ge.s32.totalorder %s18, 7
      %s25 = sphi 0, %s37
      %s26 = sphi 0, %s33
      %s27 = sphi 0, %s25
      %s28 = sphi 0, %s26
      %s29 = sphi 0, %s27
      %s30 = sphi 0, %s28
      %s48 = sphi 0, %s50
      %s51 = sphi 0, %s48
      %s52 = sphi 0, %s51
      %s68 = sphi 0, %s52
      %s82 = sphi 0, %s84
      %s85 = sphi 0, %s82
      %s86 = sphi 0, %s85
      %s102 = sphi 0, %s86
      %s108 = sphi 0, %s110
      %s111 = sphi 0, %s108
      %s112 = sphi 0, %s111
      %s128 = sphi 0, %s112
      %s134 = sphi 0, %s136
      %s137 = sphi 0, %s134
      %s138 = sphi 0, %s137
      %s154 = sphi 0, %s138
    $region4: #{tpu_custom_call.1} parent=1 // loop_header_branch
      %21 = sbr.rel (%p19) target = $region8
    $region5: #{tpu_custom_call.1} parent=1 // loop_body
      %s23 = ssub.s32 %s18, 1
      %s24 = ssub.s32 %s18, 2
      %s31 = sadd.s32 1, %s26
      %p32 = scmp.ge.s32.totalorder %s31, 5
      %s33 = scalar_select %p32, 0, %s31
      %s34 = sadd.s32 1, %s25
      %s35 = scalar_select %p32, %s34, %s25
      %p36 = scmp.ge.s32.totalorder %s35, 1
      %s37 = scalar_select %p36, 0, %s35
      %s38 = smul.u32 %s25, 5
      %s39 = sadd.s32 %s38, %s26
      %p40 = scmp.lt.s32.totalorder %s39, 4
      %s41 = scalar_select %p40, %s39, 4
      %s42 = smul.u32 %s37, 5
      %s43 = sadd.s32 %s42, %s33
      %p44 = scmp.lt.s32.totalorder %s43, 4
      %s45 = scalar_select %p44, %s43, 4
      %s46 = ssub.s32 %s41, %s45
      %p47 = scmp.eq.s32.totalorder %s46, 0
      %s49 = sadd.s32 %s48, 1
      %s50 = scalar_select %p47, %s48, %s49
      %p53 = pneg %p47
      %p54 = scmp.eq.s32.totalorder %s18, 4
      %p55 = por %p53, %p54
      %p56 = scmp.ne.s32.totalorder %s48, %s51
      %p57 = scmp.eq.s32.totalorder %s18, 0
      %p58 = por %p56, %p57
      %p59 = scmp.ne.s32.totalorder %s48, %s51
      %p60 = scmp.eq.s32.totalorder %s23, 4
      %p61 = por %p59, %p60
      %p62 = scmp.ne.s32.totalorder %s51, %s52
      %p63 = scmp.eq.s32.totalorder %s23, 0
      %p64 = por %p62, %p63
      %p65 = scmp.ne.s32.totalorder %s51, %s52
      %p66 = scmp.eq.s32.totalorder %s24, 4
      %p67 = por %p65, %p66
      %p69 = scmp.ne.s32.totalorder %s52, %s68
      %p70 = scmp.eq.s32.totalorder %s24, 0
      %p71 = por %p69, %p70
      %s72 = smul.u32 %s25, 5
      %s73 = sadd.s32 %s72, %s26
      %p74 = scmp.lt.s32.totalorder %s73, 4
      %s75 = scalar_select %p74, %s73, 4
      %s76 = smul.u32 %s37, 5
      %s77 = sadd.s32 %s76, %s33
      %p78 = scmp.lt.s32.totalorder %s77, 4
      %s79 = scalar_select %p78, %s77, 4
      %s80 = ssub.s32 %s75, %s79
      %p81 = scmp.eq.s32.totalorder %s80, 0
      %s83 = sadd.s32 %s82, 1
      %s84 = scalar_select %p81, %s82, %s83
      %p87 = pneg %p81
      %p88 = scmp.eq.s32.totalorder %s18, 4
      %p89 = por %p87, %p88
      %p90 = scmp.ne.s32.totalorder %s82, %s85
      %p91 = scmp.eq.s32.totalorder %s18, 0
      %p92 = por %p90, %p91
      %p93 = scmp.ne.s32.totalorder %s82, %s85
      %p94 = scmp.eq.s32.totalorder %s23, 4
      %p95 = por %p93, %p94
      %p96 = scmp.ne.s32.totalorder %s85, %s86
      %p97 = scmp.eq.s32.totalorder %s23, 0
      %p98 = por %p96, %p97
      %p99 = scmp.ne.s32.totalorder %s85, %s86
      %p100 = scmp.eq.s32.totalorder %s24, 4
      %p101 = por %p99, %p100
      %p103 = scmp.ne.s32.totalorder %s86, %s102
      %p104 = scmp.eq.s32.totalorder %s24, 0
      %p105 = por %p103, %p104
      %s106 = ssub.s32 %s25, %s37
      %p107 = scmp.eq.s32.totalorder %s106, 0
      %s109 = sadd.s32 %s108, 1
      %s110 = scalar_select %p107, %s108, %s109
      %p113 = pneg %p107
      %p114 = scmp.eq.s32.totalorder %s18, 4
      %p115 = por %p113, %p114
      %p116 = scmp.ne.s32.totalorder %s108, %s111
      %p117 = scmp.eq.s32.totalorder %s18, 0
      %p118 = por %p116, %p117
      %p119 = scmp.ne.s32.totalorder %s108, %s111
      %p120 = scmp.eq.s32.totalorder %s23, 4
      %p121 = por %p119, %p120
      %p122 = scmp.ne.s32.totalorder %s111, %s112
      %p123 = scmp.eq.s32.totalorder %s23, 0
      %p124 = por %p122, %p123
      %p125 = scmp.ne.s32.totalorder %s111, %s112
      %p126 = scmp.eq.s32.totalorder %s24, 4
      %p127 = por %p125, %p126
      %p129 = scmp.ne.s32.totalorder %s112, %s128
      %p130 = scmp.eq.s32.totalorder %s24, 0
      %p131 = por %p129, %p130
      %s132 = ssub.s32 %s25, %s37
      %p133 = scmp.eq.s32.totalorder %s132, 0
      %s135 = sadd.s32 %s134, 1
      %s136 = scalar_select %p133, %s134, %s135
      %p139 = pneg %p133
      %p140 = scmp.eq.s32.totalorder %s18, 4
      %p141 = por %p139, %p140
      %p142 = scmp.ne.s32.totalorder %s134, %s137
      %p143 = scmp.eq.s32.totalorder %s18, 0
      %p144 = por %p142, %p143
      %p145 = scmp.ne.s32.totalorder %s134, %s137
      %p146 = scmp.eq.s32.totalorder %s23, 4
      %p147 = por %p145, %p146
      %p148 = scmp.ne.s32.totalorder %s137, %s138
      %p149 = scmp.eq.s32.totalorder %s23, 0
      %p150 = por %p148, %p149
      %p151 = scmp.ne.s32.totalorder %s137, %s138
      %p152 = scmp.eq.s32.totalorder %s24, 4
      %p153 = por %p151, %p152
      %p155 = scmp.ne.s32.totalorder %s138, %s154
      %p156 = scmp.eq.s32.totalorder %s24, 0
      %p157 = por %p155, %p156
      %p158 = scmp.le.s32.totalorder 1, %s18
      %p159 = scmp.lt.s32.totalorder %s18, 6
      %p160 = pnand %p158, %p159
      %p161 = pneg %p160
      // Predicated region
      $region9: #{tpu_custom_call.1} parent=5 // pred_check
        _
      $region10: #{tpu_custom_call.1} parent=5 // pred_check_branch
        %163 = sbr.rel (%p160) target = $region12
      $region11: #{tpu_custom_call.1} parent=5 // pred_region
        %s164 = ssub.s32 %s18, 1
      $region12: #{tpu_custom_call.1} parent=5 // pred_fallthru
        _
      %p165 = scmp.lt.s32.totalorder %s18, 5
      // Predicated region
      $region13: #{tpu_custom_call.1} parent=5 // pred_check
        %p166 = pneg %p165
      $region14: #{tpu_custom_call.1} parent=5 // pred_check_branch
        %168 = sbr.rel (%p166) target = $region16
      $region15: #{tpu_custom_call.1} parent=5 // pred_region
        // Predicated region
        $region17: #{tpu_custom_call.1} parent=15 // pred_check
          %p169 = pneg %p58
        $region18: #{tpu_custom_call.1} parent=15 // pred_check_branch
          %171 = sbr.rel (%p169) target = $region20
        $region19: #{tpu_custom_call.1} parent=15 // pred_region
          %s172 = sand.u32 %s48, 1
          %s173 = scalar_lea.sflag [#allocation5], %s172
          %s174 = sand.u32 %s48, 1
          %s175 = smul.addr %s174, 128
          %s176 = scalar_lea.vmem [#allocation4], %s175
          %s177 = smul.u32 %s25, 5
          %s178 = sadd.s32 %s177, %s26
          %p179 = scmp.lt.s32.totalorder %s178, 4
          %s180 = scalar_select %p179, %s178, 4
          %s181 = smul.u32 16, %s180
          %s182 = ssub.s32 68, %s181
          %p183 = scmp.lt.s32.totalorder %s182, 16
          %s184 = scalar_select %p183, %s182, 16
          %s185 = smul.u32 128, %s184
          %s187 = ssub.s32 2048, %s185
          %188 = vsyncadd %s173, %s187
          %p189 = scmp.ne.s32.totalorder 0, %s185
          %s190 = smul.addr %s181, 128
          %s191 = scalar_lea.hbm %s0, %s190
          %s192 = smul.u32 8, %s184
          %s193 = sshll.u32 %s176, 4
          %s194 = int_to_ptr.vmem [resolvable:$true] %s193
          %s195 = sshll.u32 %s192, 4
          %199 = dma.hbm_to_vmem [thread:$0]  (%p189), %s191, %s195, %s194, %s173, 128, 128, 8
        $region20: #{tpu_custom_call.1} parent=15 // pred_fallthru
          _
        // Predicated region
        $region21: #{tpu_custom_call.1} parent=15 // pred_check
          %p200 = pneg %p92
        $region22: #{tpu_custom_call.1} parent=15 // pred_check_branch
          %202 = sbr.rel (%p200) target = $region24
        $region23: #{tpu_custom_call.1} parent=15 // pred_region
          %s203 = sand.u32 %s82, 1
          %s204 = scalar_lea.sflag [#allocation8], %s203
          %s205 = sand.u32 %s82, 1
          %s206 = smul.addr %s205, 128
          %s207 = scalar_lea.vmem [#allocation7], %s206
          %s208 = smul.u32 %s25, 5
          %s209 = sadd.s32 %s208, %s26
          %p210 = scmp.lt.s32.totalorder %s209, 4
          %s211 = scalar_select %p210, %s209, 4
          %s212 = smul.u32 16, %s211
          %s213 = ssub.s32 68, %s212
          %p214 = scmp.lt.s32.totalorder %s213, 16
          %s215 = scalar_select %p214, %s213, 16
          %s216 = smul.u32 128, %s215
          %s218 = ssub.s32 2048, %s216
          %219 = vsyncadd %s204, %s218
          %p220 = scmp.ne.s32.totalorder 0, %s216
          %s221 = smul.addr %s212, 128
          %s222 = scalar_lea.hbm %s1, %s221
          %s223 = smul.u32 8, %s215
          %s224 = sshll.u32 %s207, 4
          %s225 = int_to_ptr.vmem [resolvable:$true] %s224
          %s226 = sshll.u32 %s223, 4
          %230 = dma.hbm_to_vmem [thread:$0]  (%p220), %s222, %s226, %s225, %s204, 128, 128, 8
        $region24: #{tpu_custom_call.1} parent=15 // pred_fallthru
          _
      $region16: #{tpu_custom_call.1} parent=5 // pred_fallthru
        _
      %p231 = scmp.le.s32.totalorder 1, %s18
      %p232 = scmp.lt.s32.totalorder %s18, 6
      %p233 = pnand %p231, %p232
      %p234 = pneg %p233
      // Predicated region
      $region25: #{tpu_custom_call.1} parent=5 // pred_check
        _
      $region26: #{tpu_custom_call.1} parent=5 // pred_check_branch
        %236 = sbr.rel (%p233) target = $region28
      $region27: #{tpu_custom_call.1} parent=5 // pred_region
        %s237 = ssub.s32 %s18, 1
        %s238 = sand.u32 %s51, 1
        %s239 = scalar_lea.sflag [#allocation5], %s238
        %s240 = sand.u32 %s51, 1
        %s241 = smul.addr %s240, 128
        %s242 = scalar_lea.vmem [#allocation4], %s241
        // Predicated region
        $region29: #{tpu_custom_call.1} parent=27 // pred_check
          %p243 = pneg %p64
        $region30: #{tpu_custom_call.1} parent=27 // pred_check_branch
          %245 = sbr.rel (%p243) target = $region32
        $region31: #{tpu_custom_call.1} parent=27 // pred_region
          %246 = dma.done %s239, 2048
        $region32: #{tpu_custom_call.1} parent=27 // pred_fallthru
          _
        %s247 = sand.u32 %s85, 1
        %s248 = scalar_lea.sflag [#allocation8], %s247
        %s249 = sand.u32 %s85, 1
        %s250 = smul.addr %s249, 128
        %s251 = scalar_lea.vmem [#allocation7], %s250
        // Predicated region
        $region33: #{tpu_custom_call.1} parent=27 // pred_check
          %p252 = pneg %p98
        $region34: #{tpu_custom_call.1} parent=27 // pred_check_branch
          %254 = sbr.rel (%p252) target = $region36
        $region35: #{tpu_custom_call.1} parent=27 // pred_region
          %255 = dma.done %s248, 2048
        $region36: #{tpu_custom_call.1} parent=27 // pred_fallthru
          _
        %s256 = sand.u32 %s51, 1
        %s257 = scalar_lea.sflag [#allocation5], %s256
        %s258 = sand.u32 %s51, 1
        %s259 = smul.addr %s258, 128
        %s260 = scalar_lea.vmem [#allocation4], %s259
        %p261 = pneg %p64
        %p262 = pneg %p61
        %s263 = sand.u32 %s85, 1
        %s264 = scalar_lea.sflag [#allocation8], %s263
        %s265 = sand.u32 %s85, 1
        %s266 = smul.addr %s265, 128
        %s267 = scalar_lea.vmem [#allocation7], %s266
        %p268 = pneg %p98
        %p269 = pneg %p95
        %p270 = pneg %p124
        %p271 = pneg %p121
        %p272 = pneg %p150
        %p273 = pneg %p147
        %s274 = smul.u32 %s27, 5
        %s275 = sadd.s32 %s274, %s28
        %p276 = scmp.lt.s32.totalorder %s275, 4
        %s277 = scalar_select %p276, %s275, 4
        %s278 = smul.u32 16, %s277
        %s279 = ssub.s32 68, %s278
        %p280 = scmp.lt.s32.totalorder %s279, 16
        %s281 = scalar_select %p280, %s279, 16
        %s282 = smul.u32 128, %s281
        %s283 = smul.u32 %s27, 5
        %s284 = sadd.s32 %s283, %s28
        %p285 = scmp.lt.s32.totalorder %s284, 4
        %s286 = scalar_select %p285, %s284, 4
        %s287 = smul.u32 16, %s286
        %s288 = ssub.s32 68, %s287
        %p289 = scmp.lt.s32.totalorder %s288, 16
        %s290 = scalar_select %p289, %s288, 16
        %s291 = smul.u32 128, %s290
        %p292 = scmp.eq.s32.totalorder %s28, 0
        // Predicated region
        $region37: #{tpu_custom_call.1} parent=27 // pred_check
          %p293 = pneg %p292
        $region38: #{tpu_custom_call.1} parent=27 // pred_check_branch
          %295 = sbr.rel (%p293) target = $region40
        $region39: #{tpu_custom_call.1} parent=27 // pred_region
          %296 = vst [vmem:[#allocation2] sm:$0xff] 0.0
          %297 = vst [vmem:[#allocation3] sm:$0xff] 0.0
        $region40: #{tpu_custom_call.1} parent=27 // pred_fallthru
          _
        %s298 = smul.u32 %s27, 5
        %s299 = sadd.s32 %s298, %s28
        %s300 = smul.u32 %s299, 128
        %v301 = vld [vmem:[%s242] sm:$0xff]
        %v302 = vld [vmem:[%s242 + $0x8] sm:$0xff]
        %v303 = vld [vmem:[%s242 + $0x10] sm:$0xff]
        %v304 = vld [vmem:[%s242 + $0x18] sm:$0xff]
        %v305 = vld [vmem:[%s242 + $0x20] sm:$0xff]
        %v306 = vld [vmem:[%s242 + $0x28] sm:$0xff]
        %v307 = vld [vmem:[%s242 + $0x30] sm:$0xff]
        %v308 = vld [vmem:[%s242 + $0x38] sm:$0xff]
        %v309 = vld [vmem:[%s242 + $0x40] sm:$0xff]
        %v310 = vld [vmem:[%s242 + $0x48] sm:$0xff]
        %v311 = vld [vmem:[%s242 + $0x50] sm:$0xff]
        %v312 = vld [vmem:[%s242 + $0x58] sm:$0xff]
        %v313 = vld [vmem:[%s242 + $0x60] sm:$0xff]
        %v314 = vld [vmem:[%s242 + $0x68] sm:$0xff]
        %v315 = vld [vmem:[%s242 + $0x70] sm:$0xff]
        %v316 = vld [vmem:[%s242 + $0x78] sm:$0xff]
        %v317 = vld [vmem:[%s251] sm:$0xff]
        %v318 = vld [vmem:[%s251 + $0x8] sm:$0xff]
        %v319 = vld [vmem:[%s251 + $0x10] sm:$0xff]
        %v320 = vld [vmem:[%s251 + $0x18] sm:$0xff]
        %v321 = vld [vmem:[%s251 + $0x20] sm:$0xff]
        %v322 = vld [vmem:[%s251 + $0x28] sm:$0xff]
        %v323 = vld [vmem:[%s251 + $0x30] sm:$0xff]
        %v324 = vld [vmem:[%s251 + $0x38] sm:$0xff]
        %v325 = vld [vmem:[%s251 + $0x40] sm:$0xff]
        %v326 = vld [vmem:[%s251 + $0x48] sm:$0xff]
        %v327 = vld [vmem:[%s251 + $0x50] sm:$0xff]
        %v328 = vld [vmem:[%s251 + $0x58] sm:$0xff]
        %v329 = vld [vmem:[%s251 + $0x60] sm:$0xff]
        %v330 = vld [vmem:[%s251 + $0x68] sm:$0xff]
        %v331 = vld [vmem:[%s251 + $0x70] sm:$0xff]
        %v332 = vld [vmem:[%s251 + $0x78] sm:$0xff]
        %s333 = sadd.s32 %s300, 128
        %p334 = scmp.le.s32.totalorder %s333, 540
        // Predicated region
        $region41: #{tpu_custom_call.1} parent=27 // pred_check
          %p335 = pneg %p334
        $region42: #{tpu_custom_call.1} parent=27 // pred_check_branch
          %337 = sbr.rel (%p335) target = $region44
        $region43: #{tpu_custom_call.1} parent=27 // pred_region
          %vm338 = vcmp.gt.f32.partialorder %v301, 0.5
          %vm339 = vcmp.gt.f32.partialorder %v302, 0.5
          %vm340 = vcmp.gt.f32.partialorder %v303, 0.5
          %vm341 = vcmp.gt.f32.partialorder %v304, 0.5
          %vm342 = vcmp.gt.f32.partialorder %v305, 0.5
          %vm343 = vcmp.gt.f32.partialorder %v306, 0.5
          %vm344 = vcmp.gt.f32.partialorder %v307, 0.5
          %vm345 = vcmp.gt.f32.partialorder %v308, 0.5
          %vm346 = vcmp.gt.f32.partialorder %v309, 0.5
          %vm347 = vcmp.gt.f32.partialorder %v310, 0.5
          %vm348 = vcmp.gt.f32.partialorder %v311, 0.5
          %vm349 = vcmp.gt.f32.partialorder %v312, 0.5
          %vm350 = vcmp.gt.f32.partialorder %v313, 0.5
          %vm351 = vcmp.gt.f32.partialorder %v314, 0.5
          %vm352 = vcmp.gt.f32.partialorder %v315, 0.5
          %vm353 = vcmp.gt.f32.partialorder %v316, 0.5
          %v354 = vsel %vm338, %v317, 0.0
          %v355 = vsel %vm339, %v318, 0.0
          %v356 = vsel %vm340, %v319, 0.0
          %v357 = vsel %vm341, %v320, 0.0
          %v358 = vsel %vm342, %v321, 0.0
          %v359 = vsel %vm343, %v322, 0.0
          %v360 = vsel %vm344, %v323, 0.0
          %v361 = vsel %vm345, %v324, 0.0
          %v362 = vsel %vm346, %v325, 0.0
          %v363 = vsel %vm347, %v326, 0.0
          %v364 = vsel %vm348, %v327, 0.0
          %v365 = vsel %vm349, %v328, 0.0
          %v366 = vsel %vm350, %v329, 0.0
          %v367 = vsel %vm351, %v330, 0.0
          %v368 = vsel %vm352, %v331, 0.0
          %v369 = vsel %vm353, %v332, 0.0
          %v370 = vld [vmem:[#allocation2] sm:$0xff]
          %v371 = vadd.f32 %v354, %v355
          %v372 = vadd.f32 %v371, %v356
          %v373 = vadd.f32 %v372, %v357
          %v374 = vadd.f32 %v373, %v358
          %v375 = vadd.f32 %v374, %v359
          %v376 = vadd.f32 %v375, %v360
          %v377 = vadd.f32 %v376, %v361
          %v378 = vadd.f32 %v377, %v362
          %v379 = vadd.f32 %v378, %v363
          %v380 = vadd.f32 %v379, %v364
          %v381 = vadd.f32 %v380, %v365
          %v382 = vadd.f32 %v381, %v366
          %v383 = vadd.f32 %v382, %v367
          %v384 = vadd.f32 %v383, %v368
          %v385 = vadd.f32 %v384, %v369
          %v386 = vadd.f32 %v370, %v385
          %387 = vst [vmem:[#allocation2] sm:$0xff] %v386
          %v388 = vld [vmem:[#allocation3] sm:$0xff]
          %v389 = vadd.f32 %v317, %v318
          %v390 = vadd.f32 %v389, %v319
          %v391 = vadd.f32 %v390, %v320
          %v392 = vadd.f32 %v391, %v321
          %v393 = vadd.f32 %v392, %v322
          %v394 = vadd.f32 %v393, %v323
          %v395 = vadd.f32 %v394, %v324
          %v396 = vadd.f32 %v395, %v325
          %v397 = vadd.f32 %v396, %v326
          %v398 = vadd.f32 %v397, %v327
          %v399 = vadd.f32 %v398, %v328
          %v400 = vadd.f32 %v399, %v329
          %v401 = vadd.f32 %v400, %v330
          %v402 = vadd.f32 %v401, %v331
          %v403 = vadd.f32 %v402, %v332
          %v404 = vadd.f32 %v388, %v403
          %405 = vst [vmem:[#allocation3] sm:$0xff] %v404
        $region44: #{tpu_custom_call.1} parent=27 // pred_fallthru
          _
        %p406 = scmp.gt.s32.totalorder %s333, 540
        // Predicated region
        $region45: #{tpu_custom_call.1} parent=27 // pred_check
          %p407 = pneg %p406
        $region46: #{tpu_custom_call.1} parent=27 // pred_check_branch
          %409 = sbr.rel (%p407) target = $region48
        $region47: #{tpu_custom_call.1} parent=27 // pred_region
          %v410 = vlaneseq
          %v411 = vshrl.u32 %v410, 7
          %v412 = vadd.s32 %v411, 8
          %v413 = vadd.s32 %v411, 16
          %v414 = vadd.s32 %v411, 24
          %v415 = vadd.s32 %v411, 32
          %v416 = vadd.s32 %v411, 40
          %v417 = vadd.s32 %v411, 48
          %v418 = vadd.s32 %v411, 56
          %v419 = vadd.s32 %v411, 64
          %v420 = vadd.s32 %v411, 72
          %v421 = vadd.s32 %v411, 80
          %v422 = vadd.s32 %v411, 88
          %v423 = vadd.s32 %v411, 96
          %v424 = vadd.s32 %v411, 104
          %v425 = vadd.s32 %v411, 112
          %v426 = vadd.s32 %v411, 120
          %s427 = ssub.s32 540, %s300
          %v428 = vstv %s427
          %vm429 = vcmp.lt.s32.totalorder %v411, %v428
          %vm430 = vcmp.lt.s32.totalorder %v412, %v428
          %vm431 = vcmp.lt.s32.totalorder %v413, %v428
          %vm432 = vcmp.lt.s32.totalorder %v414, %v428
          %vm433 = vcmp.lt.s32.totalorder %v415, %v428
          %vm434 = vcmp.lt.s32.totalorder %v416, %v428
          %vm435 = vcmp.lt.s32.totalorder %v417, %v428
          %vm436 = vcmp.lt.s32.totalorder %v418, %v428
          %vm437 = vcmp.lt.s32.totalorder %v419, %v428
          %vm438 = vcmp.lt.s32.totalorder %v420, %v428
          %vm439 = vcmp.lt.s32.totalorder %v421, %v428
          %vm440 = vcmp.lt.s32.totalorder %v422, %v428
          %vm441 = vcmp.lt.s32.totalorder %v423, %v428
          %vm442 = vcmp.lt.s32.totalorder %v424, %v428
          %vm443 = vcmp.lt.s32.totalorder %v425, %v428
          %vm444 = vcmp.lt.s32.totalorder %v426, %v428
          %v445 = vsel %vm429, %v317, 0.0
          %v446 = vsel %vm430, %v318, 0.0
          %v447 = vsel %vm431, %v319, 0.0
          %v448 = vsel %vm432, %v320, 0.0
          %v449 = vsel %vm433, %v321, 0.0
          %v450 = vsel %vm434, %v322, 0.0
          %v451 = vsel %vm435, %v323, 0.0
          %v452 = vsel %vm436, %v324, 0.0
          %v453 = vsel %vm437, %v325, 0.0
          %v454 = vsel %vm438, %v326, 0.0
          %v455 = vsel %vm439, %v327, 0.0
          %v456 = vsel %vm440, %v328, 0.0
          %v457 = vsel %vm441, %v329, 0.0
          %v458 = vsel %vm442, %v330, 0.0
          %v459 = vsel %vm443, %v331, 0.0
          %v460 = vsel %vm444, %v332, 0.0
          %vm461 = vcmp.gt.f32.partialorder %v301, 0.5
          %vm462 = vcmp.gt.f32.partialorder %v302, 0.5
          %vm463 = vcmp.gt.f32.partialorder %v303, 0.5
          %vm464 = vcmp.gt.f32.partialorder %v304, 0.5
          %vm465 = vcmp.gt.f32.partialorder %v305, 0.5
          %vm466 = vcmp.gt.f32.partialorder %v306, 0.5
          %vm467 = vcmp.gt.f32.partialorder %v307, 0.5
          %vm468 = vcmp.gt.f32.partialorder %v308, 0.5
          %vm469 = vcmp.gt.f32.partialorder %v309, 0.5
          %vm470 = vcmp.gt.f32.partialorder %v310, 0.5
          %vm471 = vcmp.gt.f32.partialorder %v311, 0.5
          %vm472 = vcmp.gt.f32.partialorder %v312, 0.5
          %vm473 = vcmp.gt.f32.partialorder %v313, 0.5
          %vm474 = vcmp.gt.f32.partialorder %v314, 0.5
          %vm475 = vcmp.gt.f32.partialorder %v315, 0.5
          %vm476 = vcmp.gt.f32.partialorder %v316, 0.5
          %v477 = vsel %vm461, %v445, 0.0
          %v478 = vsel %vm462, %v446, 0.0
          %v479 = vsel %vm463, %v447, 0.0
          %v480 = vsel %vm464, %v448, 0.0
          %v481 = vsel %vm465, %v449, 0.0
          %v482 = vsel %vm466, %v450, 0.0
          %v483 = vsel %vm467, %v451, 0.0
          %v484 = vsel %vm468, %v452, 0.0
          %v485 = vsel %vm469, %v453, 0.0
          %v486 = vsel %vm470, %v454, 0.0
          %v487 = vsel %vm471, %v455, 0.0
          %v488 = vsel %vm472, %v456, 0.0
          %v489 = vsel %vm473, %v457, 0.0
          %v490 = vsel %vm474, %v458, 0.0
          %v491 = vsel %vm475, %v459, 0.0
          %v492 = vsel %vm476, %v460, 0.0
          %v493 = vld [vmem:[#allocation2] sm:$0xff]
          %v494 = vadd.f32 %v477, %v478
          %v495 = vadd.f32 %v494, %v479
          %v496 = vadd.f32 %v495, %v480
          %v497 = vadd.f32 %v496, %v481
          %v498 = vadd.f32 %v497, %v482
          %v499 = vadd.f32 %v498, %v483
          %v500 = vadd.f32 %v499, %v484
          %v501 = vadd.f32 %v500, %v485
          %v502 = vadd.f32 %v501, %v486
          %v503 = vadd.f32 %v502, %v487
          %v504 = vadd.f32 %v503, %v488
          %v505 = vadd.f32 %v504, %v489
          %v506 = vadd.f32 %v505, %v490
          %v507 = vadd.f32 %v506, %v491
          %v508 = vadd.f32 %v507, %v492
          %v509 = vadd.f32 %v493, %v508
          %510 = vst [vmem:[#allocation2] sm:$0xff] %v509
          %v511 = vld [vmem:[#allocation3] sm:$0xff]
          %v512 = vadd.f32 %v445, %v446
          %v513 = vadd.f32 %v512, %v447
          %v514 = vadd.f32 %v513, %v448
          %v515 = vadd.f32 %v514, %v449
          %v516 = vadd.f32 %v515, %v450
          %v517 = vadd.f32 %v516, %v451
          %v518 = vadd.f32 %v517, %v452
          %v519 = vadd.f32 %v518, %v453
          %v520 = vadd.f32 %v519, %v454
          %v521 = vadd.f32 %v520, %v455
          %v522 = vadd.f32 %v521, %v456
          %v523 = vadd.f32 %v522, %v457
          %v524 = vadd.f32 %v523, %v458
          %v525 = vadd.f32 %v524, %v459
          %v526 = vadd.f32 %v525, %v460
          %v527 = vadd.f32 %v511, %v526
          %528 = vst [vmem:[#allocation3] sm:$0xff] %v527
        $region48: #{tpu_custom_call.1} parent=27 // pred_fallthru
          _
        %p529 = scmp.eq.s32.totalorder %s28, 4
        // Predicated region
        $region49: #{tpu_custom_call.1} parent=27 // pred_check
          %p530 = pneg %p529
        $region50: #{tpu_custom_call.1} parent=27 // pred_check_branch
          %532 = sbr.rel (%p530) target = $region52
        $region51: #{tpu_custom_call.1} parent=27 // pred_region
          %v533 = vld [vmem:[#allocation2] sm:$0xff]
          %534 = vst [vmem:[#allocation9] sm:$0xff] %v533
          %v535 = vld [vmem:[#allocation3] sm:$0xff]
          %536 = vst [vmem:[#allocation10] sm:$0xff] %v535
        $region52: #{tpu_custom_call.1} parent=27 // pred_fallthru
          _
        // Predicated region
        $region53: #{tpu_custom_call.1} parent=27 // pred_check
          %p537 = pneg %p121
        $region54: #{tpu_custom_call.1} parent=27 // pred_check_branch
          %539 = sbr.rel (%p537) target = $region56
        $region55: #{tpu_custom_call.1} parent=27 // pred_region
          %s541 = ssub.s32 128, 128
          %542 = vsyncadd [#allocation6], %s541
          %s543 = smul.addr %s27, 128
          %s544 = scalar_lea.hbm %s2, %s543
          %s546 = sshll.u32 [#allocation9], 4
          %s547 = int_to_ptr.vmem [resolvable:$true] %s546
          %549 = dma.vmem_to_hbm [thread:$0]  %s547, 128, %s544, [#allocation6]
        $region56: #{tpu_custom_call.1} parent=27 // pred_fallthru
          _
        // Predicated region
        $region57: #{tpu_custom_call.1} parent=27 // pred_check
          %p550 = pneg %p147
        $region58: #{tpu_custom_call.1} parent=27 // pred_check_branch
          %552 = sbr.rel (%p550) target = $region60
        $region59: #{tpu_custom_call.1} parent=27 // pred_region
          %s554 = ssub.s32 128, 128
          %555 = vsyncadd [#allocation11], %s554
          %s556 = smul.addr %s27, 128
          %s557 = scalar_lea.hbm %s3, %s556
          %s559 = sshll.u32 [#allocation10], 4
          %s560 = int_to_ptr.vmem [resolvable:$true] %s559
          %562 = dma.vmem_to_hbm [thread:$0]  %s560, 128, %s557, [#allocation11]
        $region60: #{tpu_custom_call.1} parent=27 // pred_fallthru
          _
        // Predicated region
        $region61: #{tpu_custom_call.1} parent=27 // pred_check
          %p563 = pneg %p121
        $region62: #{tpu_custom_call.1} parent=27 // pred_check_branch
          %565 = sbr.rel (%p563) target = $region64
        $region63: #{tpu_custom_call.1} parent=27 // pred_region
          %566 = dma.done [#allocation6], 128
        $region64: #{tpu_custom_call.1} parent=27 // pred_fallthru
          _
        // Predicated region
        $region65: #{tpu_custom_call.1} parent=27 // pred_check
          %p567 = pneg %p147
        $region66: #{tpu_custom_call.1} parent=27 // pred_check_branch
          %569 = sbr.rel (%p567) target = $region68
        $region67: #{tpu_custom_call.1} parent=27 // pred_region
          %570 = dma.done [#allocation11], 128
        $region68: #{tpu_custom_call.1} parent=27 // pred_fallthru
          _
      $region28: #{tpu_custom_call.1} parent=5 // pred_fallthru
        _
      %p571 = scmp.le.s32.totalorder 2, %s18
      // Predicated region
      $region69: #{tpu_custom_call.1} parent=5 // pred_check
        %p572 = pneg %p571
      $region70: #{tpu_custom_call.1} parent=5 // pred_check_branch
        %574 = sbr.rel (%p572) target = $region72
      $region71: #{tpu_custom_call.1} parent=5 // pred_region
        %s575 = ssub.s32 %s18, 2
      $region72: #{tpu_custom_call.1} parent=5 // pred_fallthru
        _
    $region6: #{tpu_custom_call.1} parent=1 // loop_footer
      %s22 = sadd.s32 1, %s18
    $region7: #{tpu_custom_call.1} parent=1 // loop_footer_branch
      %17 = sbr.rel target = $region3
    $region8: #{tpu_custom_call.1} parent=1 // loop_exit
      _
    %576 = vsyncpa [#allocation5], 1
    %s577 = scalar_lea.sflag [#allocation5], 1
    %578 = vsyncpa %s577, 1
    %579 = vsyncpa [#allocation8], 1
    %s580 = scalar_lea.sflag [#allocation8], 1
    %581 = vsyncpa %s580, 1
    %582 = vsyncpa [#allocation6], 1
    %s583 = scalar_lea.sflag [#allocation6], 1
    %584 = vsyncpa %s583, 1
    %585 = vsyncpa [#allocation11], 1

</llo_original>
